<compile_context>
chip_gen: v6e
topology: v6e:2x2x1
jax: 0.10.0
libtpu: 0.0.40
codegen_flags: <defaults>
</compile_context>

<pallas_src>
import functools

import jax
import jax.numpy as jnp
from jax.experimental import pallas as pl
from jax.experimental.pallas import tpu as pltpu


def msa_head_kernel(x_ref, w_ref, b_ref, o_ref, *, d_head, compute_dtype):
    # x_ref: (S, Dh)   w_ref: (Dh, 3*Dh) [compute_dtype]   b_ref: (1, 3*Dh) [f32]
    # o_ref: (S, Dh)
    x = x_ref[...].astype(compute_dtype)

    # Fused q/k/v projection: one MXU matmul, f32 accumulation, f32 bias add.
    qkv = jnp.dot(x, w_ref[...], preferred_element_type=jnp.float32) + b_ref[...]

    q = qkv[:, 0 * d_head:1 * d_head]        # pre-scaled by 1/sqrt(Dh) in the wrapper
    k = qkv[:, 1 * d_head:2 * d_head]
    v = qkv[:, 2 * d_head:3 * d_head]

    # Scores (bf16 MXU operands, f32 accumulate) + numerically stable softmax in f32.
    s = jnp.dot(q.astype(compute_dtype), k.astype(compute_dtype).T,
                preferred_element_type=jnp.float32)                       # (S, S)
    s = s - jnp.max(s, axis=-1, keepdims=True)
    e = jnp.exp(s)                                                         # f32 EUP
    l = jnp.sum(e, axis=-1, keepdims=True)                                 # (S, 1)

    # Deferred normalization: PV on unnormalized scores, then one per-row scale on
    # the (S, Dh) result (exact reciprocal — it is off the critical VALU path now).
    pv = jnp.dot(e.astype(compute_dtype), v.astype(compute_dtype),
                 preferred_element_type=jnp.float32)                       # (S, Dh)
    o_ref[...] = (pv * pl.reciprocal(l, approx=False)).astype(o_ref.dtype)


def my_msa(x, wq_t, wk_t, wv_t, bq, bk, bv, *, compute_dtype=jnp.bfloat16):
    """x: (N, S, d) f32; wX_t: (H, Dh, Dh) pre-transposed Linear weights; bX: (H, Dh).

    Equivalent to the PyTorch MyMSA forward: per-head Linear(d_head, d_head) for
    q/k/v on that head's feature slice, softmax(q k^T / sqrt(d_head)) @ v, heads
    concatenated back along the feature axis. Returns (N, S, d) in x.dtype.
    `compute_dtype` controls the MXU operand dtype (bf16 recommended on TPU).
    """
    N, S, d = x.shape
    H, Dh, _ = wq_t.shape
    assert H * Dh == d

    scale = 1.0 / (Dh ** 0.5)
    # Fold the attention scale into the Q projection, fuse q/k/v weights & biases.
    wqkv = jnp.concatenate([wq_t * scale, wk_t, wv_t], axis=-1).astype(compute_dtype)
    bqkv = jnp.concatenate([bq * scale, bk, bv], axis=-1).reshape(H, 1, 3 * Dh)
    bqkv = bqkv.astype(jnp.float32)          # bias add stays on the f32 VPU path

    # (N, S, d) -> (N, H, S, Dh): every grid step sees a full-extent (S, Dh) slab.
    xh = x.reshape(N, S, H, Dh).transpose(0, 2, 1, 3)

    kernel = functools.partial(msa_head_kernel, d_head=Dh, compute_dtype=compute_dtype)

    out_h = pl.pallas_call(
        kernel,
        out_shape=jax.ShapeDtypeStruct((N, H, S, Dh), x.dtype),
        grid=(N, H),
        in_specs=[
            # One (sequence, head) slab per grid step; leading dims squeezed.
            pl.BlockSpec((None, None, S, Dh), lambda n, h: (n, h, 0, 0)),
            # Per-head fused weights / biases (index depends only on h).
            pl.BlockSpec((None, Dh, 3 * Dh), lambda n, h: (h, 0, 0)),
            pl.BlockSpec((None, 1, 3 * Dh), lambda n, h: (h, 0, 0)),
        ],
        out_specs=pl.BlockSpec((None, None, S, Dh), lambda n, h: (n, h, 0, 0)),
        compiler_params=pltpu.CompilerParams(
            dimension_semantics=("parallel", "parallel")),
    )(xh, wqkv, bqkv)

    # (N, H, S, Dh) -> (N, S, d): one-time wrapper-side layout plumbing.
    return out_h.transpose(0, 2, 1, 3).reshape(N, S, d)


def my_msa_ref(x, wq_t, wk_t, wv_t, bq, bk, bv):
    """Pure-JAX reference mirroring the PyTorch forward (all f32)."""
    N, S, d = x.shape
    H, Dh, _ = wq_t.shape
    outs = []
    for n in range(N):
        heads = []
        for h in range(H):
            seq = x[n, :, h * Dh:(h + 1) * Dh]
            q = seq @ wq_t[h] + bq[h]
            k = seq @ wk_t[h] + bk[h]
            v = seq @ wv_t[h] + bv[h]
            a = jax.nn.softmax((q @ k.T) / (Dh ** 0.5), axis=-1)
            heads.append(a @ v)
        outs.append(jnp.concatenate(heads, axis=-1))
    return jnp.stack(outs, axis=0)


if __name__ == "__main__":
    # Small shapes consistent with the module: batch=2, seq=8, d=32, n_heads=2.
    N, S, d, H = 2, 8, 32, 2
    Dh = d // H

    key = jax.random.PRNGKey(0)
    kx, kq, kk, kv, kbq, kbk, kbv = jax.random.split(key, 7)

    x = jax.random.normal(kx, (N, S, d), dtype=jnp.float32)
    # Per-head Linear(d_head, d_head) weights (stored already transposed) and biases.
    wq_t = jax.random.normal(kq, (H, Dh, Dh), dtype=jnp.float32) * 0.1
    wk_t = jax.random.normal(kk, (H, Dh, Dh), dtype=jnp.float32) * 0.1
    wv_t = jax.random.normal(kv, (H, Dh, Dh), dtype=jnp.float32) * 0.1
    bq = jax.random.normal(kbq, (H, Dh), dtype=jnp.float32) * 0.1
    bk = jax.random.normal(kbk, (H, Dh), dtype=jnp.float32) * 0.1
    bv = jax.random.normal(kbv, (H, Dh), dtype=jnp.float32) * 0.1

    ref = my_msa_ref(x, wq_t, wk_t, wv_t, bq, bk, bv)

    # Exact-path check (f32 MXU operands): algorithmically identical to the module.
    out_f32 = jax.block_until_ready(
        my_msa(x, wq_t, wk_t, wv_t, bq, bk, bv, compute_dtype=jnp.float32))
    assert out_f32.shape == (N, S, d)
    assert jnp.allclose(out_f32, ref, atol=1e-4, rtol=1e-4), "f32 mismatch vs reference"

    # Fast-path check (bf16 MXU operands, f32 accumulation / softmax math).
    out_bf16 = jax.block_until_ready(
        my_msa(x, wq_t, wk_t, wv_t, bq, bk, bv, compute_dtype=jnp.bfloat16))
    assert out_bf16.shape == (N, S, d)
    assert jnp.allclose(out_bf16, ref, atol=2e-2, rtol=2e-2), "bf16 mismatch vs reference"

    print("KERNEL_OK")
</pallas_src>

<mosaic_0001>
module attributes {stable_mosaic.version = 11 : i64} {
  func.func @msa_head_kernel(%arg0: i32, %arg1: i32, %arg2: memref<1x1x8x16xf32, #tpu.memory_space<vmem>>, %arg3: memref<1x16x48xf32, #tpu.memory_space<vmem>>, %arg4: memref<1x1x48xf32, #tpu.memory_space<vmem>>, %arg5: memref<1x1x8x16xf32, #tpu.memory_space<vmem>>) attributes {dimension_semantics = [#tpu.dimension_semantics<parallel>, #tpu.dimension_semantics<parallel>], iteration_bounds = array<i64: 2, 2>, scalar_prefetch = 0 : i64, scratch_operands = 0 : i64, tpu.core_type = #tpu.core_type<tc>, window_params = [{transform_indices = @transform_0, window_bounds = array<i64: 1, 1, 8, 16>}, {transform_indices = @transform_1, window_bounds = array<i64: 1, 16, 48>}, {transform_indices = @transform_2, window_bounds = array<i64: 1, 1, 48>}, {transform_indices = @transform_3, window_bounds = array<i64: 1, 1, 8, 16>}]} {
    %c0 = arith.constant 0 : index
    %c0_0 = arith.constant 0 : index
    %c0_1 = arith.constant 0 : index
    %c0_2 = arith.constant 0 : index
    %0 = vector.load %arg2[%c0, %c0_0, %c0_1, %c0_2] : memref<1x1x8x16xf32, #tpu.memory_space<vmem>>, vector<1x1x8x16xf32>
    %1 = vector.shape_cast %0 : vector<1x1x8x16xf32> to vector<8x16xf32>
    %c0_3 = arith.constant 0 : index
    %c0_4 = arith.constant 0 : index
    %c0_5 = arith.constant 0 : index
    %2 = vector.load %arg3[%c0_3, %c0_4, %c0_5] : memref<1x16x48xf32, #tpu.memory_space<vmem>>, vector<1x16x48xf32>
    %3 = vector.shape_cast %2 : vector<1x16x48xf32> to vector<16x48xf32>
    %cst = arith.constant dense<0.000000e+00> : vector<8x48xf32>
    %4 = tpu.matmul %1, %3, %cst {dimension_numbers = #tpu.dot_dimension_numbers<[1], [0], [0], [1], [0, 0, 1, 1], [], []>} : vector<8x16xf32>, vector<16x48xf32>, vector<8x48xf32> -> vector<8x48xf32>
    %c0_6 = arith.constant 0 : index
    %c0_7 = arith.constant 0 : index
    %c0_8 = arith.constant 0 : index
    %5 = vector.load %arg4[%c0_6, %c0_7, %c0_8] : memref<1x1x48xf32, #tpu.memory_space<vmem>>, vector<1x1x48xf32>
    %6 = vector.shape_cast %5 : vector<1x1x48xf32> to vector<1x48xf32>
    %7 = vector.broadcast %6 : vector<1x48xf32> to vector<8x48xf32>
    %8 = arith.addf %4, %7 : vector<8x48xf32>
    %9 = vector.extract_strided_slice %8 {offsets = [0, 0], sizes = [8, 16], strides = [1, 1]} : vector<8x48xf32> to vector<8x16xf32>
    %10 = vector.extract_strided_slice %8 {offsets = [0, 16], sizes = [8, 16], strides = [1, 1]} : vector<8x48xf32> to vector<8x16xf32>
    %11 = vector.extract_strided_slice %8 {offsets = [0, 32], sizes = [8, 16], strides = [1, 1]} : vector<8x48xf32> to vector<8x16xf32>
    %12 = tpu.transpose %10, [1, 0] : vector<8x16xf32> -> vector<16x8xf32>
    %cst_9 = arith.constant dense<0.000000e+00> : vector<8x8xf32>
    %13 = tpu.matmul %9, %12, %cst_9 {dimension_numbers = #tpu.dot_dimension_numbers<[1], [0], [0], [1], [0, 0, 1, 1], [], []>} : vector<8x16xf32>, vector<16x8xf32>, vector<8x8xf32> -> vector<8x8xf32>
    %cst_10 = arith.constant dense<0xFF800000> : vector<8xf32>
    %14 = vector.multi_reduction <maximumf>, %13, %cst_10 [1] : vector<8x8xf32> to vector<8xf32>
    %15 = vector.shape_cast %14 : vector<8xf32> to vector<8x1xf32>
    %16 = vector.broadcast %15 : vector<8x1xf32> to vector<8x8xf32>
    %17 = arith.subf %13, %16 : vector<8x8xf32>
    %18 = math.exp %17 : vector<8x8xf32>
    %cst_11 = arith.constant dense<0.000000e+00> : vector<8xf32>
    %19 = vector.multi_reduction <add>, %18, %cst_11 [1] : vector<8x8xf32> to vector<8xf32>
    %20 = vector.shape_cast %19 : vector<8xf32> to vector<8x1xf32>
    %cst_12 = arith.constant dense<0.000000e+00> : vector<8x16xf32>
    %21 = tpu.matmul %18, %11, %cst_12 {dimension_numbers = #tpu.dot_dimension_numbers<[1], [0], [0], [1], [0, 0, 1, 1], [], []>} : vector<8x8xf32>, vector<8x16xf32>, vector<8x16xf32> -> vector<8x16xf32>
    %22 = tpu.reciprocal %20 : vector<8x1xf32> -> vector<8x1xf32>
    %23 = vector.broadcast %22 : vector<8x1xf32> to vector<8x16xf32>
    %24 = arith.mulf %21, %23 : vector<8x16xf32>
    %c0_13 = arith.constant 0 : index
    %c0_14 = arith.constant 0 : index
    %c0_15 = arith.constant 0 : index
    %c0_16 = arith.constant 0 : index
    %25 = vector.load %arg5[%c0_13, %c0_14, %c0_15, %c0_16] : memref<1x1x8x16xf32, #tpu.memory_space<vmem>>, vector<1x1x8x16xf32>
    %26 = vector.shape_cast %25 : vector<1x1x8x16xf32> to vector<8x16xf32>
    %27 = vector.shape_cast %24 : vector<8x16xf32> to vector<1x1x8x16xf32>
    tpu.vector_store %arg5[%c0_13, %c0_14, %c0_15, %c0_16], %27 {strides = array<i32>} : memref<1x1x8x16xf32, #tpu.memory_space<vmem>>, vector<1x1x8x16xf32>,
    return
  }
  func.func @transform_0(%arg0: i32, %arg1: i32) -> (i32, i32, i32, i32) {
    %c0_i32 = arith.constant 0 : i32
    %c0_i32_0 = arith.constant 0 : i32
    %c0_i32_1 = arith.constant 0 : i32
    return %arg0, %arg1, %c0_i32, %c0_i32_0 : i32, i32, i32, i32
  }
  func.func @transform_1(%arg0: i32, %arg1: i32) -> (i32, i32, i32) {
    %c0_i32 = arith.constant 0 : i32
    %c0_i32_0 = arith.constant 0 : i32
    %c0_i32_1 = arith.constant 0 : i32
    return %arg1, %c0_i32, %c0_i32_0 : i32, i32, i32
  }
  func.func @transform_2(%arg0: i32, %arg1: i32) -> (i32, i32, i32) {
    %c0_i32 = arith.constant 0 : i32
    %c0_i32_0 = arith.constant 0 : i32
    %c0_i32_1 = arith.constant 0 : i32
    return %arg1, %c0_i32, %c0_i32_0 : i32, i32, i32
  }
  func.func @transform_3(%arg0: i32, %arg1: i32) -> (i32, i32, i32, i32) {
    %c0_i32 = arith.constant 0 : i32
    %c0_i32_0 = arith.constant 0 : i32
    %c0_i32_1 = arith.constant 0 : i32
    return %arg0, %arg1, %c0_i32, %c0_i32_0 : i32, i32, i32, i32
  }
}

</mosaic_0001>

<llo_original>
// kernel: tpu_custom_call.1
$region0: #{tpu_custom_call.1}
  #allocation0 [shape = 'u32[]', space=smem, size = 0x4, offset = 0x4, fixed_abs, tag = 'smem constant byte address 0x4 - core index']
  #allocation1 [shape = 'u32[144,128]{1,0:T(1,128)}', space=vmem, size = 0x12000, scoped, tag = 'internal scratch']
  %s0 = inlined_call_operand.hbm [shape: f32[2,2,8,16], index: 0, kind: input, shape index: {}]
  %s1 = inlined_call_operand.hbm [shape: f32[2,16,48], index: 1, kind: input, shape index: {}]
  %s2 = inlined_call_operand.vmem [shape: f32[2,1,48], index: 2, kind: input, shape index: {}]
  %s3 = inlined_call_operand.hbm [shape: f32[2,2,8,16], index: 3, kind: output, shape index: {}]
  %s4 = sld [smem:[#allocation0]]
  $region53: #{tpu_custom_call.1} parent=0
    _
  %s6 = ssub.s32 1, %s4
  %s7 = scalar_select 0, %s6, %s4
  $region1: #{tpu_custom_call.1} parent=0
    #allocation2 [shape = 'u8[8192]{0}', space=vmem, size = 0x2000, scoped, tag = 'input window, operand 0']
    #allocation3 [shape = 's32[2]{0}', space=sflag, size = 0x8, scoped, tag = 'scoped memory for tpu_custom_call.1']
    #allocation4 [shape = 's32[2]{0}', space=sflag, size = 0x8, scoped, tag = 'scoped memory for tpu_custom_call.1']
    #allocation5 [shape = 'u8[16384]{0}', space=vmem, size = 0x4000, scoped, tag = 'input window, operand 1']
    #allocation6 [shape = 's32[2]{0}', space=sflag, size = 0x8, scoped, tag = 'scoped memory for tpu_custom_call.1']
    #allocation7 [shape = 'u8[8192]{0}', space=vmem, size = 0x2000, scoped, tag = 'output window, operand 0']
    %8 = vsyncpa [#allocation3], 0
    %s9 = scalar_lea.sflag [#allocation3], 1
    %10 = vsyncpa %s9, 0
    %11 = vsyncpa [#allocation6], 0
    %s12 = scalar_lea.sflag [#allocation6], 1
    %13 = vsyncpa %s12, 0
    %14 = vsyncpa [#allocation4], 0
    %s15 = scalar_lea.sflag [#allocation4], 1
    %16 = vsyncpa %s15, 0
    loop: start=0, step=1, limit=6
    $region2: #{tpu_custom_call.1} parent=1 // loop_pre_header
      _
    $region3: #{tpu_custom_call.1} parent=1 // loop_header
      %s18 = sphi 0, %s22
      %p19 = scmp.ge.s32.totalorder %s18, 6
      %s25 = sphi 0, %s37
      %s26 = sphi 0, %s33
      %s27 = sphi 0, %s25
      %s28 = sphi 0, %s26
      %s29 = sphi 0, %s27
      %s30 = sphi 0, %s28
      %s42 = sphi 0, %s44
      %s45 = sphi 0, %s42
      %s46 = sphi 0, %s45
      %s62 = sphi 0, %s46
      %s68 = sphi 0, %s70
      %s71 = sphi 0, %s68
      %s72 = sphi 0, %s71
      %s88 = sphi 0, %s72
      %s94 = sphi 0, %s96
      %s97 = sphi 0, %s94
      %s98 = sphi 0, %s97
      %s114 = sphi 0, %s98
      %s122 = sphi 0, %s124
      %s125 = sphi 0, %s122
      %s126 = sphi 0, %s125
      %s142 = sphi 0, %s126
    $region4: #{tpu_custom_call.1} parent=1 // loop_header_branch
      %21 = sbr.rel (%p19) target = $region8
    $region5: #{tpu_custom_call.1} parent=1 // loop_body
      %s23 = ssub.s32 %s18, 1
      %s24 = ssub.s32 %s18, 2
      %s31 = sadd.s32 1, %s26
      %p32 = scmp.ge.s32.totalorder %s31, 2
      %s33 = scalar_select %p32, 0, %s31
      %s34 = sadd.s32 1, %s25
      %s35 = scalar_select %p32, %s34, %s25
      %p36 = scmp.ge.s32.totalorder %s35, 2
      %s37 = scalar_select %p36, 0, %s35
      %s38 = ssub.s32 %s25, %s37
      %s39 = ssub.s32 %s26, %s33
      %s40 = sor.u32 %s38, %s39
      %p41 = scmp.eq.s32.totalorder %s40, 0
      %s43 = sadd.s32 %s42, 1
      %s44 = scalar_select %p41, %s42, %s43
      %p47 = pneg %p41
      %p48 = scmp.eq.s32.totalorder %s18, 3
      %p49 = por %p47, %p48
      %p50 = scmp.ne.s32.totalorder %s42, %s45
      %p51 = scmp.eq.s32.totalorder %s18, 0
      %p52 = por %p50, %p51
      %p53 = scmp.ne.s32.totalorder %s42, %s45
      %p54 = scmp.eq.s32.totalorder %s23, 3
      %p55 = por %p53, %p54
      %p56 = scmp.ne.s32.totalorder %s45, %s46
      %p57 = scmp.eq.s32.totalorder %s23, 0
      %p58 = por %p56, %p57
      %p59 = scmp.ne.s32.totalorder %s45, %s46
      %p60 = scmp.eq.s32.totalorder %s24, 3
      %p61 = por %p59, %p60
      %p63 = scmp.ne.s32.totalorder %s46, %s62
      %p64 = scmp.eq.s32.totalorder %s24, 0
      %p65 = por %p63, %p64
      %s66 = ssub.s32 %s26, %s33
      %p67 = scmp.eq.s32.totalorder %s66, 0
      %s69 = sadd.s32 %s68, 1
      %s70 = scalar_select %p67, %s68, %s69
      %p73 = pneg %p67
      %p74 = scmp.eq.s32.totalorder %s18, 3
      %p75 = por %p73, %p74
      %p76 = scmp.ne.s32.totalorder %s68, %s71
      %p77 = scmp.eq.s32.totalorder %s18, 0
      %p78 = por %p76, %p77
      %p79 = scmp.ne.s32.totalorder %s68, %s71
      %p80 = scmp.eq.s32.totalorder %s23, 3
      %p81 = por %p79, %p80
      %p82 = scmp.ne.s32.totalorder %s71, %s72
      %p83 = scmp.eq.s32.totalorder %s23, 0
      %p84 = por %p82, %p83
      %p85 = scmp.ne.s32.totalorder %s71, %s72
      %p86 = scmp.eq.s32.totalorder %s24, 3
      %p87 = por %p85, %p86
      %p89 = scmp.ne.s32.totalorder %s72, %s88
      %p90 = scmp.eq.s32.totalorder %s24, 0
      %p91 = por %p89, %p90
      %s92 = ssub.s32 %s26, %s33
      %p93 = scmp.eq.s32.totalorder %s92, 0
      %s95 = sadd.s32 %s94, 1
      %s96 = scalar_select %p93, %s94, %s95
      %p99 = pneg %p93
      %p100 = scmp.eq.s32.totalorder %s18, 3
      %p101 = por %p99, %p100
      %p102 = scmp.ne.s32.totalorder %s94, %s97
      %p103 = scmp.eq.s32.totalorder %s18, 0
      %p104 = por %p102, %p103
      %p105 = scmp.ne.s32.totalorder %s94, %s97
      %p106 = scmp.eq.s32.totalorder %s23, 3
      %p107 = por %p105, %p106
      %p108 = scmp.ne.s32.totalorder %s97, %s98
      %p109 = scmp.eq.s32.totalorder %s23, 0
      %p110 = por %p108, %p109
      %p111 = scmp.ne.s32.totalorder %s97, %s98
      %p112 = scmp.eq.s32.totalorder %s24, 3
      %p113 = por %p111, %p112
      %p115 = scmp.ne.s32.totalorder %s98, %s114
      %p116 = scmp.eq.s32.totalorder %s24, 0
      %p117 = por %p115, %p116
      %s118 = ssub.s32 %s25, %s37
      %s119 = ssub.s32 %s26, %s33
      %s120 = sor.u32 %s118, %s119
      %p121 = scmp.eq.s32.totalorder %s120, 0
      %s123 = sadd.s32 %s122, 1
      %s124 = scalar_select %p121, %s122, %s123
      %p127 = pneg %p121
      %p128 = scmp.eq.s32.totalorder %s18, 3
      %p129 = por %p127, %p128
      %p130 = scmp.ne.s32.totalorder %s122, %s125
      %p131 = scmp.eq.s32.totalorder %s18, 0
      %p132 = por %p130, %p131
      %p133 = scmp.ne.s32.totalorder %s122, %s125
      %p134 = scmp.eq.s32.totalorder %s23, 3
      %p135 = por %p133, %p134
      %p136 = scmp.ne.s32.totalorder %s125, %s126
      %p137 = scmp.eq.s32.totalorder %s23, 0
      %p138 = por %p136, %p137
      %p139 = scmp.ne.s32.totalorder %s125, %s126
      %p140 = scmp.eq.s32.totalorder %s24, 3
      %p141 = por %p139, %p140
      %p143 = scmp.ne.s32.totalorder %s126, %s142
      %p144 = scmp.eq.s32.totalorder %s24, 0
      %p145 = por %p143, %p144
      %p146 = scmp.le.s32.totalorder 1, %s18
      %p147 = scmp.lt.s32.totalorder %s18, 5
      %p148 = pnand %p146, %p147
      %p149 = pneg %p148
      // Predicated region
      $region9: #{tpu_custom_call.1} parent=5 // pred_check
        _
      $region10: #{tpu_custom_call.1} parent=5 // pred_check_branch
        %151 = sbr.rel (%p148) target = $region12
      $region11: #{tpu_custom_call.1} parent=5 // pred_region
        %s152 = ssub.s32 %s18, 1
      $region12: #{tpu_custom_call.1} parent=5 // pred_fallthru
        _
      %p153 = scmp.lt.s32.totalorder %s18, 4
      // Predicated region
      $region13: #{tpu_custom_call.1} parent=5 // pred_check
        %p154 = pneg %p153
      $region14: #{tpu_custom_call.1} parent=5 // pred_check_branch
        %156 = sbr.rel (%p154) target = $region16
      $region15: #{tpu_custom_call.1} parent=5 // pred_region
        // Predicated region
        $region17: #{tpu_custom_call.1} parent=15 // pred_check
          %p157 = pneg %p52
        $region18: #{tpu_custom_call.1} parent=15 // pred_check_branch
          %159 = sbr.rel (%p157) target = $region20
        $region19: #{tpu_custom_call.1} parent=15 // pred_region
          %s160 = sand.u32 %s42, 1
          %s161 = scalar_lea.sflag [#allocation3], %s160
          %s162 = sand.u32 %s42, 1
          %s163 = smul.addr %s162, 8
          %s164 = scalar_lea.vmem [#allocation2], %s163
          %s166 = ssub.s32 128, 128
          %167 = vsyncadd %s161, %s166
          %s168 = smul.addr %s25, 2
          %s169 = sadd.s32 %s26, %s168
          %s170 = smul.addr %s169, 128
          %s171 = scalar_lea.hbm %s0, %s170
          %s173 = sshll.u32 %s164, 4
          %s174 = int_to_ptr.vmem [resolvable:$true] %s173
          %176 = dma.hbm_to_vmem [thread:$0]  %s171, 128, %s174, %s161
        $region20: #{tpu_custom_call.1} parent=15 // pred_fallthru
          _
        // Predicated region
        $region21: #{tpu_custom_call.1} parent=15 // pred_check
          %p177 = pneg %p78
        $region22: #{tpu_custom_call.1} parent=15 // pred_check_branch
          %179 = sbr.rel (%p177) target = $region24
        $region23: #{tpu_custom_call.1} parent=15 // pred_region
          %s180 = sand.u32 %s68, 1
          %s181 = scalar_lea.sflag [#allocation6], %s180
          %s182 = sand.u32 %s68, 1
          %s183 = smul.addr %s182, 16
          %s184 = scalar_lea.vmem [#allocation5], %s183
          %s186 = ssub.s32 256, 256
          %187 = vsyncadd %s181, %s186
          %s188 = smul.addr %s26, 2
          %s189 = smul.addr %s188, 128
          %s190 = scalar_lea.hbm %s1, %s189
          %s191 = sshll.u32 %s184, 4
          %s192 = int_to_ptr.vmem [resolvable:$true] %s191
          %197 = dma.hbm_to_vmem [thread:$0]  %s190, 256, %s192, %s181, 128, 128, 8
        $region24: #{tpu_custom_call.1} parent=15 // pred_fallthru
          _
        // Predicated region
        $region25: #{tpu_custom_call.1} parent=15 // pred_check
          %p198 = pneg %p104
        $region26: #{tpu_custom_call.1} parent=15 // pred_check_branch
          %200 = sbr.rel (%p198) target = $region28
        $region27: #{tpu_custom_call.1} parent=15 // pred_region
          %p201 = scmp.lt.s32.totalorder %s26, 1
          %s202 = scalar_select %p201, %s26, 1
          %s203 = scalar_lea.vmem %s2, %s202
        $region28: #{tpu_custom_call.1} parent=15 // pred_fallthru
          _
      $region16: #{tpu_custom_call.1} parent=5 // pred_fallthru
        _
      %p204 = scmp.le.s32.totalorder 1, %s18
      %p205 = scmp.lt.s32.totalorder %s18, 5
      %p206 = pnand %p204, %p205
      %p207 = pneg %p206
      // Predicated region
      $region29: #{tpu_custom_call.1} parent=5 // pred_check
        _
      $region30: #{tpu_custom_call.1} parent=5 // pred_check_branch
        %209 = sbr.rel (%p206) target = $region32
      $region31: #{tpu_custom_call.1} parent=5 // pred_region
        %s210 = ssub.s32 %s18, 1
        %s211 = sand.u32 %s45, 1
        %s212 = scalar_lea.sflag [#allocation3], %s211
        %s213 = sand.u32 %s45, 1
        %s214 = smul.addr %s213, 8
        %s215 = scalar_lea.vmem [#allocation2], %s214
        // Predicated region
        $region33: #{tpu_custom_call.1} parent=31 // pred_check
          %p216 = pneg %p58
        $region34: #{tpu_custom_call.1} parent=31 // pred_check_branch
          %218 = sbr.rel (%p216) target = $region36
        $region35: #{tpu_custom_call.1} parent=31 // pred_region
          %219 = dma.done %s212, 128
        $region36: #{tpu_custom_call.1} parent=31 // pred_fallthru
          _
        %s220 = sand.u32 %s71, 1
        %s221 = scalar_lea.sflag [#allocation6], %s220
        %s222 = sand.u32 %s71, 1
        %s223 = smul.addr %s222, 16
        %s224 = scalar_lea.vmem [#allocation5], %s223
        // Predicated region
        $region37: #{tpu_custom_call.1} parent=31 // pred_check
          %p225 = pneg %p84
        $region38: #{tpu_custom_call.1} parent=31 // pred_check_branch
          %227 = sbr.rel (%p225) target = $region40
        $region39: #{tpu_custom_call.1} parent=31 // pred_region
          %228 = dma.done %s221, 256
        $region40: #{tpu_custom_call.1} parent=31 // pred_fallthru
          _
        %s229 = sand.u32 %s45, 1
        %s230 = scalar_lea.sflag [#allocation3], %s229
        %s231 = sand.u32 %s45, 1
        %s232 = smul.addr %s231, 8
        %s233 = scalar_lea.vmem [#allocation2], %s232
        %p234 = pneg %p58
        %p235 = pneg %p55
        %s236 = sand.u32 %s71, 1
        %s237 = scalar_lea.sflag [#allocation6], %s236
        %s238 = sand.u32 %s71, 1
        %s239 = smul.addr %s238, 16
        %s240 = scalar_lea.vmem [#allocation5], %s239
        %p241 = pneg %p84
        %p242 = pneg %p81
        %p243 = scmp.lt.s32.totalorder %s28, 1
        %s244 = scalar_select %p243, %s28, 1
        %s245 = scalar_lea.vmem %s2, %s244
        %p246 = pneg %p110
        %p247 = pneg %p107
        %p248 = pneg %p138
        %p249 = pneg %p135
        %s250 = sand.u32 %s125, 1
        %s251 = scalar_lea.sflag [#allocation4], %s250
        %s252 = sand.u32 %s125, 1
        %s253 = smul.addr %s252, 8
        %s254 = scalar_lea.vmem [#allocation7], %s253
        %p255 = scmp.lt.s32.totalorder %s28, 1
        %s256 = scalar_select %p255, %s28, 1
        %s257 = scalar_lea.vmem %s2, %s256
        %v258 = vld [vmem:[%s215] sm:$0xff]
        %v259 = vld [vmem:[%s224] sm:$0xff]
        %v260 = vld [vmem:[%s224 + $0x8] sm:$0xff]
        %v261 = vld [vmem:[%s257] sm:$0x1]
        %v263 = vlaneseq
        %v264 = vshrl.u32 %v263, 7
        %v265 = vsub.s32 0, %v264
        %v266 = vrot.slane %v261, %v265
        %vm268 = vcmask 130048
        %v270 = vsel %vm268, %v258, 0
        %272 = vmatprep.subr.mxu0 0.0
        %273 = vmatpush1.msra.mxu0 0.0
        %274 = vmatprep.subr.mxu0 0.0
        %275 = vmatpush1.msra.mxu0 0.0
        %276 = vmatprep.subr.mxu0 0.0
        %277 = vmatpush1.msra.mxu0 0.0
        %278 = vmatprep.subr.mxu0 0.0
        %279 = vmatpush1.msra.mxu0 0.0
        %280 = vmatprep.subr.mxu0 0.0
        %281 = vmatpush1.msra.mxu0 0.0
        %282 = vmatprep.subr.mxu0 0.0
        %283 = vmatpush1.msra.mxu0 0.0
        %284 = vmatprep.subr.mxu0 0.0
        %285 = vmatpush1.msra.mxu0 0.0
        %286 = vmatprep.subr.mxu0 0.0
        %287 = vmatpush1.msra.mxu0 0.0
        %288 = vmatprep.subr.mxu0 0.0
        %289 = vmatpush1.msra.mxu0 0.0
        %290 = vmatprep.subr.mxu0 0.0
        %291 = vmatpush1.msra.mxu0 0.0
        %292 = vmatprep.subr.mxu0 0.0
        %293 = vmatpush1.msra.mxu0 0.0
        %294 = vmatprep.subr.mxu0 0.0
        %295 = vmatpush1.msra.mxu0 0.0
        %296 = vmatprep.subr.mxu0 0.0
        %297 = vmatpush1.msra.mxu0 0.0
        %298 = vmatprep.subr.mxu0 0.0
        %299 = vmatpush1.msra.mxu0 0.0
        %300 = vmatprep.subr.mxu0 0.0
        %301 = vmatpush1.msra.mxu0 %v260
        %302 = vmatprep.subr.mxu0 0.0
        %303 = vmatpush1.msra.mxu0 %v259
        %304 = vmatprep.subr.mxu0 0.0
        %305 = vmatpush2.msra.mxu0 0.0
        %306 = vmatprep.subr.mxu0 0.0
        %307 = vmatpush2.msra.mxu0 0.0
        %308 = vmatprep.subr.mxu0 0.0
        %309 = vmatpush2.msra.mxu0 0.0
        %310 = vmatprep.subr.mxu0 0.0
        %311 = vmatpush2.msra.mxu0 0.0
        %312 = vmatprep.subr.mxu0 0.0
        %313 = vmatpush2.msra.mxu0 0.0
        %314 = vmatprep.subr.mxu0 0.0
        %315 = vmatpush2.msra.mxu0 0.0
        %316 = vmatprep.subr.mxu0 0.0
        %317 = vmatpush2.msra.mxu0 0.0
        %318 = vmatprep.subr.mxu0 0.0
        %319 = vmatpush2.msra.mxu0 0.0
        %320 = vmatprep.subr.mxu0 0.0
        %321 = vmatpush2.msra.mxu0 0.0
        %322 = vmatprep.subr.mxu0 0.0
        %323 = vmatpush2.msra.mxu0 0.0
        %324 = vmatprep.subr.mxu0 0.0
        %325 = vmatpush2.msra.mxu0 0.0
        %326 = vmatprep.subr.mxu0 0.0
        %327 = vmatpush2.msra.mxu0 0.0
        %328 = vmatprep.subr.mxu0 0.0
        %329 = vmatpush2.msra.mxu0 0.0
        %330 = vmatprep.subr.mxu0 0.0
        %331 = vmatpush2.msra.mxu0 0.0
        %332 = vmatprep.subr.mxu0 0.0
        %333 = vmatpush2.msra.mxu0 0.0
        %334 = vmatprep.subr.mxu0 0.0
        %335 = vmatpush2.msra.mxu0 0.0
        %336 = vmatprep.mubr.f32.mxu0 0.0
        %337 = vmatmul.mubr.f32.gmra.mxu0 %v270
        %v338 = vpop.f32.mrf.mxu0
        %v339 = vadd.f32 %v266, %v338
        %v340 = vpop.f32.mrf.mxu0
        %341 = vdwg.mxu0
        %343 = vrot.lane.b32.xlu0 %v339, 112
        %v344 = vpop.permute.xlu0 %343
        %v345 = vsel %vm268, %v339, 0
        %v347 = vsel %vm268, %v344, 0
        %349 = vmatprep.subr.mxu0 0.0
        %350 = vmatpush1.xpose.msra.mxu0 0.0
        %351 = vmatprep.subr.mxu0 0.0
        %352 = vmatpush1.xpose.msra.mxu0 0.0
        %353 = vmatprep.subr.mxu0 0.0
        %354 = vmatpush1.xpose.msra.mxu0 0.0
        %355 = vmatprep.subr.mxu0 0.0
        %356 = vmatpush1.xpose.msra.mxu0 0.0
        %357 = vmatprep.subr.mxu0 0.0
        %358 = vmatpush1.xpose.msra.mxu0 0.0
        %359 = vmatprep.subr.mxu0 0.0
        %360 = vmatpush1.xpose.msra.mxu0 0.0
        %361 = vmatprep.subr.mxu0 0.0
        %362 = vmatpush1.xpose.msra.mxu0 0.0
        %363 = vmatprep.subr.mxu0 0.0
        %364 = vmatpush1.xpose.msra.mxu0 0.0
        %365 = vmatprep.subr.mxu0 0.0
        %366 = vmatpush1.xpose.msra.mxu0 0.0
        %367 = vmatprep.subr.mxu0 0.0
        %368 = vmatpush1.xpose.msra.mxu0 0.0
        %369 = vmatprep.subr.mxu0 0.0
        %370 = vmatpush1.xpose.msra.mxu0 0.0
        %371 = vmatprep.subr.mxu0 0.0
        %372 = vmatpush1.xpose.msra.mxu0 0.0
        %373 = vmatprep.subr.mxu0 0.0
        %374 = vmatpush1.xpose.msra.mxu0 0.0
        %375 = vmatprep.subr.mxu0 0.0
        %376 = vmatpush1.xpose.msra.mxu0 0.0
        %377 = vmatprep.subr.mxu0 0.0
        %378 = vmatpush1.xpose.msra.mxu0 0.0
        %379 = vmatprep.subr.mxu0 0.0
        %380 = vmatpush1.xpose.msra.mxu0 %v347
        %381 = vmatprep.subr.mxu0 0.0
        %382 = vmatpush2.xpose.msra.mxu0 0.0
        %383 = vmatprep.subr.mxu0 0.0
        %384 = vmatpush2.xpose.msra.mxu0 0.0
        %385 = vmatprep.subr.mxu0 0.0
        %386 = vmatpush2.xpose.msra.mxu0 0.0
        %387 = vmatprep.subr.mxu0 0.0
        %388 = vmatpush2.xpose.msra.mxu0 0.0
        %389 = vmatprep.subr.mxu0 0.0
        %390 = vmatpush2.xpose.msra.mxu0 0.0
        %391 = vmatprep.subr.mxu0 0.0
        %392 = vmatpush2.xpose.msra.mxu0 0.0
        %393 = vmatprep.subr.mxu0 0.0
        %394 = vmatpush2.xpose.msra.mxu0 0.0
        %395 = vmatprep.subr.mxu0 0.0
        %396 = vmatpush2.xpose.msra.mxu0 0.0
        %397 = vmatprep.subr.mxu0 0.0
        %398 = vmatpush2.xpose.msra.mxu0 0.0
        %399 = vmatprep.subr.mxu0 0.0
        %400 = vmatpush2.xpose.msra.mxu0 0.0
        %401 = vmatprep.subr.mxu0 0.0
        %402 = vmatpush2.xpose.msra.mxu0 0.0
        %403 = vmatprep.subr.mxu0 0.0
        %404 = vmatpush2.xpose.msra.mxu0 0.0
        %405 = vmatprep.subr.mxu0 0.0
        %406 = vmatpush2.xpose.msra.mxu0 0.0
        %407 = vmatprep.subr.mxu0 0.0
        %408 = vmatpush2.xpose.msra.mxu0 0.0
        %409 = vmatprep.subr.mxu0 0.0
        %410 = vmatpush2.xpose.msra.mxu0 0.0
        %411 = vmatprep.subr.mxu0 0.0
        %412 = vmatpush2.xpose.msra.mxu0 0.0
        %413 = vmatprep.mubr.f32.mxu0 0.0
        %414 = vmatmul.mubr.f32.gmra.mxu0 %v345
        %v415 = vpop.f32.mrf.mxu0
        %v416 = vadd.f32 0.0, %v415
        %v417 = vpop.f32.mrf.mxu0
        %418 = vdwg.mxu0
        %vm419 = vcmask 64512
        %v420 = vsel %vm419, %v416, -inf
        %421 = vmax.xlane.f32.xlu0 %v420
        %v422 = vpop.xlane.xlu0 %421
        %v423 = vsub.f32 %v416, %v422
        %v424 = vmul.f32 %v423, 1.442695
        %v425 = vpow.pop %v424
        %v426 = vsel %vm419, %v425, 0.0
        %427 = vadd.xlane.f32.xlu0 %v426
        %v428 = vpop.xlane.xlu0 %427
        %429 = vrot.lane.b32.xlu0 %v339, 96
        %v430 = vpop.permute.xlu0 %429
        %v433 = vsel %vm419, %v425, 0
        %435 = vmatprep.subr.mxu0 0.0
        %436 = vmatpush1.msra.mxu0 0.0
        %437 = vmatprep.subr.mxu0 0.0
        %438 = vmatpush1.msra.mxu0 0.0
        %439 = vmatprep.subr.mxu0 0.0
        %440 = vmatpush1.msra.mxu0 0.0
        %441 = vmatprep.subr.mxu0 0.0
        %442 = vmatpush1.msra.mxu0 0.0
        %443 = vmatprep.subr.mxu0 0.0
        %444 = vmatpush1.msra.mxu0 0.0
        %445 = vmatprep.subr.mxu0 0.0
        %446 = vmatpush1.msra.mxu0 0.0
        %447 = vmatprep.subr.mxu0 0.0
        %448 = vmatpush1.msra.mxu0 0.0
        %449 = vmatprep.subr.mxu0 0.0
        %450 = vmatpush1.msra.mxu0 0.0
        %451 = vmatprep.subr.mxu0 0.0
        %452 = vmatpush1.msra.mxu0 0.0
        %453 = vmatprep.subr.mxu0 0.0
        %454 = vmatpush1.msra.mxu0 0.0
        %455 = vmatprep.subr.mxu0 0.0
        %456 = vmatpush1.msra.mxu0 0.0
        %457 = vmatprep.subr.mxu0 0.0
        %458 = vmatpush1.msra.mxu0 0.0
        %459 = vmatprep.subr.mxu0 0.0
        %460 = vmatpush1.msra.mxu0 0.0
        %461 = vmatprep.subr.mxu0 0.0
        %462 = vmatpush1.msra.mxu0 0.0
        %463 = vmatprep.subr.mxu0 0.0
        %464 = vmatpush1.msra.mxu0 0.0
        %465 = vmatprep.subr.mxu0 0.0
        %466 = vmatpush1.msra.mxu0 %v430
        %467 = vmatprep.subr.mxu0 0.0
        %468 = vmatpush2.msra.mxu0 0.0
        %469 = vmatprep.subr.mxu0 0.0
        %470 = vmatpush2.msra.mxu0 0.0
        %471 = vmatprep.subr.mxu0 0.0
        %472 = vmatpush2.msra.mxu0 0.0
        %473 = vmatprep.subr.mxu0 0.0
        %474 = vmatpush2.msra.mxu0 0.0
        %475 = vmatprep.subr.mxu0 0.0
        %476 = vmatpush2.msra.mxu0 0.0
        %477 = vmatprep.subr.mxu0 0.0
        %478 = vmatpush2.msra.mxu0 0.0
        %479 = vmatprep.subr.mxu0 0.0
        %480 = vmatpush2.msra.mxu0 0.0
        %481 = vmatprep.subr.mxu0 0.0
        %482 = vmatpush2.msra.mxu0 0.0
        %483 = vmatprep.subr.mxu0 0.0
        %484 = vmatpush2.msra.mxu0 0.0
        %485 = vmatprep.subr.mxu0 0.0
        %486 = vmatpush2.msra.mxu0 0.0
        %487 = vmatprep.subr.mxu0 0.0
        %488 = vmatpush2.msra.mxu0 0.0
        %489 = vmatprep.subr.mxu0 0.0
        %490 = vmatpush2.msra.mxu0 0.0
        %491 = vmatprep.subr.mxu0 0.0
        %492 = vmatpush2.msra.mxu0 0.0
        %493 = vmatprep.subr.mxu0 0.0
        %494 = vmatpush2.msra.mxu0 0.0
        %495 = vmatprep.subr.mxu0 0.0
        %496 = vmatpush2.msra.mxu0 0.0
        %497 = vmatprep.subr.mxu0 0.0
        %498 = vmatpush2.msra.mxu0 0.0
        %499 = vmatprep.mubr.f32.mxu0 0.0
        %500 = vmatmul.mubr.f32.gmra.mxu0 %v433
        %v501 = vpop.f32.mrf.mxu0
        %v502 = vadd.f32 0.0, %v501
        %v503 = vpop.f32.mrf.mxu0
        %504 = vdwg.mxu0
        %v505 = vrcp.pop %v428
        %v506 = vmul.f32 %v502, %v505
        %507 = vst.msk [vmem:[%s254] sm:$0xff] %vm268, %v506
        %s508 = sand.u32 %s125, 1
        %s509 = scalar_lea.sflag [#allocation4], %s508
        %s510 = sand.u32 %s125, 1
        %s511 = smul.addr %s510, 8
        %s512 = scalar_lea.vmem [#allocation7], %s511
        // Predicated region
        $region41: #{tpu_custom_call.1} parent=31 // pred_check
          %p513 = pneg %p135
        $region42: #{tpu_custom_call.1} parent=31 // pred_check_branch
          %515 = sbr.rel (%p513) target = $region44
        $region43: #{tpu_custom_call.1} parent=31 // pred_region
          %s517 = ssub.s32 128, 128
          %518 = vsyncadd %s509, %s517
          %s519 = smul.addr %s27, 2
          %s520 = sadd.s32 %s28, %s519
          %s521 = smul.addr %s520, 128
          %s522 = scalar_lea.hbm %s3, %s521
          %s524 = sshll.u32 %s512, 4
          %s525 = int_to_ptr.vmem [resolvable:$true] %s524
          %527 = dma.vmem_to_hbm [thread:$0]  %s525, 128, %s522, %s509
        $region44: #{tpu_custom_call.1} parent=31 // pred_fallthru
          _
      $region32: #{tpu_custom_call.1} parent=5 // pred_fallthru
        _
      %p528 = scmp.le.s32.totalorder 2, %s18
      // Predicated region
      $region45: #{tpu_custom_call.1} parent=5 // pred_check
        %p529 = pneg %p528
      $region46: #{tpu_custom_call.1} parent=5 // pred_check_branch
        %531 = sbr.rel (%p529) target = $region48
      $region47: #{tpu_custom_call.1} parent=5 // pred_region
        %s532 = ssub.s32 %s18, 2
        // Predicated region
        $region49: #{tpu_custom_call.1} parent=47 // pred_check
          %p533 = pneg %p141
        $region50: #{tpu_custom_call.1} parent=47 // pred_check_branch
          %535 = sbr.rel (%p533) target = $region52
        $region51: #{tpu_custom_call.1} parent=47 // pred_region
          %s536 = sand.u32 %s126, 1
          %s537 = scalar_lea.sflag [#allocation4], %s536
          %s538 = sand.u32 %s126, 1
          %s539 = smul.addr %s538, 8
          %s540 = scalar_lea.vmem [#allocation7], %s539
          %541 = dma.done %s537, 128
        $region52: #{tpu_custom_call.1} parent=47 // pred_fallthru
          _
      $region48: #{tpu_custom_call.1} parent=5 // pred_fallthru
        _
    $region6: #{tpu_custom_call.1} parent=1 // loop_footer
      %s22 = sadd.s32 1, %s18
    $region7: #{tpu_custom_call.1} parent=1 // loop_footer_branch
      %17 = sbr.rel target = $region3
    $region8: #{tpu_custom_call.1} parent=1 // loop_exit
      _
    %542 = vsyncpa [#allocation3], 1
    %s543 = scalar_lea.sflag [#allocation3], 1
    %544 = vsyncpa %s543, 1
    %545 = vsyncpa [#allocation6], 1
    %s546 = scalar_lea.sflag [#allocation6], 1
    %547 = vsyncpa %s546, 1
    %548 = vsyncpa [#allocation4], 1
    %s549 = scalar_lea.sflag [#allocation4], 1
    %550 = vsyncpa %s549, 1

</llo_original>
